<compile_context>
chip_gen: v6e
topology: v6e:2x2x1
jax: 0.10.0
libtpu: 0.0.40
codegen_flags: <defaults>
</compile_context>

<pallas_src>
import jax
import jax.numpy as jnp
import numpy as np
from jax.experimental import pallas as pl
from jax.experimental.pallas import tpu as pltpu


def _replication_matrix(w: int, s: int, fused_vertical: bool, k_splits: int) -> jax.Array:
    """0/1 matrix mapping an input row (W cols) to its replicated output lanes.

    fused_vertical=True  -> shape (k_splits*W, s*s*W): super-row column
                            c = kh*(W*s) + w'*s + kw is fed by input column (c % (W*s)) // s.
    fused_vertical=False -> shape (k_splits*W, s*W): one kh stripe only.
    The block is stacked k_splits times along rows to match a K=k_splits*W contraction.
    """
    ow = w * s
    n_out = s * ow if fused_vertical else ow
    cols = np.arange(n_out)
    src = (cols % ow) // s
    m = (src[None, :] == np.arange(w)[:, None]).astype(np.float32)
    m = np.concatenate([m] * k_splits, axis=0)
    return jnp.asarray(m, dtype=jnp.bfloat16)   # 0/1 is exact in bf16


def _make_kernel(s: int, w: int, fused_vertical: bool, mode: str):
    sw = s * w

    def kernel(x_ref, m_ref, o_ref):
        x = x_ref[...]                                   # (TILE_R, W)
        if mode == "f32_split":
            # Exact 3-way bf16 split: x == x0 + x1 + x2 exactly (finite normal f32).
            # Single fused K=3W matmul against the row-stacked 0/1 matrix; the MXU's
            # in-order f32 accumulation reproduces the sequential (x0+x1)+x2 sum exactly.
            # TODO(synk): non-finite / f32-subnormal inputs are not bit-exact through
            # the split (inf -> NaN); module's test regime is finite normals.
            x0 = x.astype(jnp.bfloat16)
            r1 = x - x0.astype(jnp.float32)
            x1 = r1.astype(jnp.bfloat16)
            x2 = (r1 - x1.astype(jnp.float32)).astype(jnp.bfloat16)
            xk = jnp.concatenate([x0, x1, x2], axis=1)   # (TILE_R, 3W)
            y = jnp.dot(xk, m_ref[...], preferred_element_type=jnp.float32)
        elif mode == "bf16_cast":
            # bf16 passthrough; int8/uint8 -> bf16 is exact, selection matmul is exact.
            y = jnp.dot(x.astype(jnp.bfloat16), m_ref[...],
                        preferred_element_type=jnp.float32)
        else:
            # TODO(synk): no exact MXU route for this dtype; VPU/XLU broadcast fallback.
            t_r = x.shape[0]
            rep = jnp.broadcast_to(x[:, :, None], (t_r, w, s)).reshape(t_r, sw)
            if fused_vertical:
                y = jnp.broadcast_to(rep[:, None, :], (t_r, s, sw)).reshape(t_r, s * sw)
            else:
                y = rep

        y = y.astype(o_ref.dtype)
        if fused_vertical:
            o_ref[...] = y                               # (TILE_R, s*s*W)
        else:
            # s*W is a multiple of 128: unrolled full-vreg, lane-aligned stores.
            for kh in range(s):
                o_ref[:, kh * sw:(kh + 1) * sw] = y

    return kernel


def interpolate_nearest(x, scale_factor: int = 4):
    """x: (N, C, H, W) -> (N, C, H*s, W*s), nearest-neighbor (integer scale)."""
    # TODO(synk): only mode='nearest' with integer scale_factor (the module defaults).
    s = int(scale_factor)
    assert s == scale_factor and s >= 1, "integer scale_factor only"
    if s == 1:
        return x

    n, c, h, w = x.shape
    ow = w * s
    ows = s * ow                           # super-row width: one input row -> s output rows
    r = n * c * h
    dtype = x.dtype

    if dtype == jnp.float32:
        mode, k_splits = "f32_split", 3
    elif dtype in (jnp.bfloat16, jnp.int8, jnp.uint8):
        mode, k_splits = "bf16_cast", 1
    else:
        mode, k_splits = "fallback", 1

    # Drop the kh factor from the matrix when each kh stripe is lane-aligned;
    # keep the fused s*s*W matrix for tiny W so stores stay unmasked (e.g. W=16 -> 256 lanes).
    fused_vertical = (ow % 128) != 0

    # Row tiling: ~4 MiB output blocks, rounded to the dtype's sublane packing.
    pack = max(8, 32 // dtype.itemsize)                  # f32:8, bf16:16, int8:32
    target_rows = max(1, (4 * 1024 * 1024) // (ows * dtype.itemsize))
    tile_r = max(pack, (target_rows // pack) * pack)
    if tile_r >= r:
        tile_r = r                                       # full dim is always layout-legal
    grid = (pl.cdiv(r, tile_r),)                         # ragged last block is masked

    x2d = x.reshape(r, w)
    m = _replication_matrix(w, s, fused_vertical, k_splits)
    km, nm = m.shape

    # TODO(synk): for very large W the (k_splits*W, n_out) matrix grows as O(W^2);
    # add a W-tile grid axis (and pl.Buffered(1) on the constant matrix spec) before
    # it threatens v7x's 64 MiB/TC VMEM.
    out2d = pl.pallas_call(
        _make_kernel(s, w, fused_vertical, mode),
        out_shape=jax.ShapeDtypeStruct((r, ows), dtype),
        grid_spec=pltpu.PrefetchScalarGridSpec(
            num_scalar_prefetch=0,
            grid=grid,
            in_specs=[
                pl.BlockSpec((tile_r, w), lambda i: (i, 0)),
                pl.BlockSpec((km, nm), lambda i: (0, 0)),   # constant index -> fetched once
            ],
            out_specs=pl.BlockSpec((tile_r, ows), lambda i: (i, 0)),
        ),
        compiler_params=pltpu.CompilerParams(
            dimension_semantics=("parallel",),              # megacore-shardable row axis
            vmem_limit_bytes=32 * 1024 * 1024,
        ),
    )(x2d, m)

    # (r, s*ow): output rows s*rho .. s*rho+s-1 are contiguous, so this reshape is free.
    return out2d.reshape(n, c, h * s, ow)


if __name__ == "__main__":
    key = jax.random.PRNGKey(0)
    n, c, h, w = 2, 4, 16, 16
    scale = 4
    x = jax.random.normal(key, (n, c, h, w), dtype=jnp.float32)

    out = interpolate_nearest(x, scale_factor=scale)
    out = jax.block_until_ready(out)

    # Reference: nearest-neighbor upsample (integer scale) == repeat along H and W.
    x_np = np.asarray(x)
    ref = np.repeat(np.repeat(x_np, scale, axis=2), scale, axis=3)

    assert out.shape == (n, c, h * scale, w * scale), out.shape
    np.testing.assert_allclose(np.asarray(out), ref, rtol=0, atol=0)
    print("KERNEL_OK")
</pallas_src>

<mosaic_0001>
module attributes {stable_mosaic.version = 11 : i64} {
  func.func @kernel(%arg0: i32, %arg1: memref<128x16xf32, #tpu.memory_space<vmem>>, %arg2: memref<48x256xbf16, #tpu.memory_space<vmem>>, %arg3: memref<128x256xf32, #tpu.memory_space<vmem>>) attributes {dimension_semantics = [#tpu.dimension_semantics<parallel>], iteration_bounds = array<i64: 1>, scalar_prefetch = 0 : i64, scratch_operands = 0 : i64, tpu.core_type = #tpu.core_type<tc>, window_params = [{transform_indices = @transform_0, window_bounds = array<i64: 128, 16>}, {pipeline_mode = #tpu.pipeline_mode<synchronous>, transform_indices = @transform_1, window_bounds = array<i64: 48, 256>}, {transform_indices = @transform_2, window_bounds = array<i64: 128, 256>}]} {
    %c0 = arith.constant 0 : index
    %c0_0 = arith.constant 0 : index
    %0 = vector.load %arg1[%c0, %c0_0] : memref<128x16xf32, #tpu.memory_space<vmem>>, vector<128x16xf32>
    %1 = arith.truncf %0 : vector<128x16xf32> to vector<128x16xbf16>
    %2 = arith.extf %1 : vector<128x16xbf16> to vector<128x16xf32>
    %3 = arith.subf %0, %2 : vector<128x16xf32>
    %4 = arith.truncf %3 : vector<128x16xf32> to vector<128x16xbf16>
    %5 = arith.extf %4 : vector<128x16xbf16> to vector<128x16xf32>
    %6 = arith.subf %3, %5 : vector<128x16xf32>
    %7 = arith.truncf %6 : vector<128x16xf32> to vector<128x16xbf16>
    %8 = tpu.concatenate %1, %4, %7 in 1 : vector<128x16xbf16>, vector<128x16xbf16>, vector<128x16xbf16> -> vector<128x48xbf16>
    %c0_1 = arith.constant 0 : index
    %c0_2 = arith.constant 0 : index
    %9 = vector.load %arg2[%c0_1, %c0_2] : memref<48x256xbf16, #tpu.memory_space<vmem>>, vector<48x256xbf16>
    %cst = arith.constant dense<0.000000e+00> : vector<128x256xf32>
    %10 = tpu.matmul %8, %9, %cst {dimension_numbers = #tpu.dot_dimension_numbers<[1], [0], [0], [1], [0, 0, 1, 1], [], []>} : vector<128x48xbf16>, vector<48x256xbf16>, vector<128x256xf32> -> vector<128x256xf32>
    %c0_3 = arith.constant 0 : index
    %c0_4 = arith.constant 0 : index
    %11 = vector.load %arg3[%c0_3, %c0_4] : memref<128x256xf32, #tpu.memory_space<vmem>>, vector<128x256xf32>
    tpu.vector_store %arg3[%c0_3, %c0_4], %10 {strides = array<i32>} : memref<128x256xf32, #tpu.memory_space<vmem>>, vector<128x256xf32>,
    return
  }
  func.func @transform_0(%arg0: i32) -> (i32, i32) {
    %c0_i32 = arith.constant 0 : i32
    %c0_i32_0 = arith.constant 0 : i32
    return %arg0, %c0_i32 : i32, i32
  }
  func.func @transform_1(%arg0: i32) -> (i32, i32) {
    %c0_i32 = arith.constant 0 : i32
    %c0_i32_0 = arith.constant 0 : i32
    %c0_i32_1 = arith.constant 0 : i32
    return %c0_i32, %c0_i32_0 : i32, i32
  }
  func.func @transform_2(%arg0: i32) -> (i32, i32) {
    %c0_i32 = arith.constant 0 : i32
    %c0_i32_0 = arith.constant 0 : i32
    return %arg0, %c0_i32 : i32, i32
  }
}

</mosaic_0001>

<llo_original>
// kernel: tpu_custom_call.1
$region0: #{tpu_custom_call.1}
  #allocation0 [shape = 'u32[]', space=smem, size = 0x4, offset = 0x4, fixed_abs, tag = 'smem constant byte address 0x4 - core index']
  #allocation1 [shape = 'u32[144,128]{1,0:T(1,128)}', space=vmem, size = 0x12000, scoped, tag = 'internal scratch']
  %s0 = inlined_call_operand.vmem [shape: f32[128,16], index: 0, kind: input, shape index: {}]
  %s1 = inlined_call_operand.vmem [shape: bf16[48,256], index: 1, kind: input, shape index: {}]
  %s2 = inlined_call_operand.hbm [shape: f32[128,256], index: 2, kind: output, shape index: {}]
  %s3 = sld [smem:[#allocation0]]
  $region18: #{tpu_custom_call.1} parent=0
    _
  %s5 = ssub.s32 1, %s3
  %s6 = scalar_select 0, %s5, %s3
  $region1: #{tpu_custom_call.1} parent=0
    #allocation2 [shape = 'u8[131072]{0}', space=vmem, size = 0x20000, scoped, tag = 'output window, operand 0, single buffered']
    #allocation3 [shape = 's32[1]{0}', space=sflag, size = 0x4, scoped, tag = 'scoped memory for tpu_custom_call.1']
    %7 = vsyncpa [#allocation3], 0
    // Predicated region
    $region2: #{tpu_custom_call.1} parent=1 // pred_check
      _
    $region3: #{tpu_custom_call.1} parent=1 // pred_check_branch
      %9 = sbr.rel (0) target = $region5
    $region4: #{tpu_custom_call.1} parent=1 // pred_region
      _
    $region5: #{tpu_custom_call.1} parent=1 // pred_fallthru
      _
    // Predicated region
    $region6: #{tpu_custom_call.1} parent=1 // pred_check
      _
    $region7: #{tpu_custom_call.1} parent=1 // pred_check_branch
      %11 = sbr.rel (0) target = $region9
    $region8: #{tpu_custom_call.1} parent=1 // pred_region
      _
    $region9: #{tpu_custom_call.1} parent=1 // pred_fallthru
      _
    %v13 = vld [vmem:[%s0] sm:$0xff]
    %v14 = vld [vmem:[%s0 + $0x8] sm:$0xff]
    %v15 = vld [vmem:[%s0 + $0x10] sm:$0xff]
    %v16 = vld [vmem:[%s0 + $0x18] sm:$0xff]
    %v17 = vld [vmem:[%s0 + $0x20] sm:$0xff]
    %v18 = vld [vmem:[%s0 + $0x28] sm:$0xff]
    %v19 = vld [vmem:[%s0 + $0x30] sm:$0xff]
    %v20 = vld [vmem:[%s0 + $0x38] sm:$0xff]
    %v21 = vld [vmem:[%s0 + $0x40] sm:$0xff]
    %v22 = vld [vmem:[%s0 + $0x48] sm:$0xff]
    %v23 = vld [vmem:[%s0 + $0x50] sm:$0xff]
    %v24 = vld [vmem:[%s0 + $0x58] sm:$0xff]
    %v25 = vld [vmem:[%s0 + $0x60] sm:$0xff]
    %v26 = vld [vmem:[%s0 + $0x68] sm:$0xff]
    %v27 = vld [vmem:[%s0 + $0x70] sm:$0xff]
    %v28 = vld [vmem:[%s0 + $0x78] sm:$0xff]
    %v29 = vpack.c.bf16 %v14, %v13
    %v30 = vpack.c.bf16 %v16, %v15
    %v31 = vpack.c.bf16 %v18, %v17
    %v32 = vpack.c.bf16 %v20, %v19
    %v33 = vpack.c.bf16 %v22, %v21
    %v34 = vpack.c.bf16 %v24, %v23
    %v35 = vpack.c.bf16 %v26, %v25
    %v36 = vpack.c.bf16 %v28, %v27
    %v37 = vunpack.c.l.bf16 %v29
    %v38 = vunpack.c.h.bf16 %v29
    %v39 = vunpack.c.l.bf16 %v30
    %v40 = vunpack.c.h.bf16 %v30
    %v41 = vunpack.c.l.bf16 %v31
    %v42 = vunpack.c.h.bf16 %v31
    %v43 = vunpack.c.l.bf16 %v32
    %v44 = vunpack.c.h.bf16 %v32
    %v45 = vunpack.c.l.bf16 %v33
    %v46 = vunpack.c.h.bf16 %v33
    %v47 = vunpack.c.l.bf16 %v34
    %v48 = vunpack.c.h.bf16 %v34
    %v49 = vunpack.c.l.bf16 %v35
    %v50 = vunpack.c.h.bf16 %v35
    %v51 = vunpack.c.l.bf16 %v36
    %v52 = vunpack.c.h.bf16 %v36
    %v53 = vsub.f32 %v13, %v37
    %v54 = vsub.f32 %v14, %v38
    %v55 = vsub.f32 %v15, %v39
    %v56 = vsub.f32 %v16, %v40
    %v57 = vsub.f32 %v17, %v41
    %v58 = vsub.f32 %v18, %v42
    %v59 = vsub.f32 %v19, %v43
    %v60 = vsub.f32 %v20, %v44
    %v61 = vsub.f32 %v21, %v45
    %v62 = vsub.f32 %v22, %v46
    %v63 = vsub.f32 %v23, %v47
    %v64 = vsub.f32 %v24, %v48
    %v65 = vsub.f32 %v25, %v49
    %v66 = vsub.f32 %v26, %v50
    %v67 = vsub.f32 %v27, %v51
    %v68 = vsub.f32 %v28, %v52
    %v69 = vpack.c.bf16 %v54, %v53
    %v70 = vpack.c.bf16 %v56, %v55
    %v71 = vpack.c.bf16 %v58, %v57
    %v72 = vpack.c.bf16 %v60, %v59
    %v73 = vpack.c.bf16 %v62, %v61
    %v74 = vpack.c.bf16 %v64, %v63
    %v75 = vpack.c.bf16 %v66, %v65
    %v76 = vpack.c.bf16 %v68, %v67
    %v77 = vunpack.c.l.bf16 %v69
    %v78 = vunpack.c.h.bf16 %v69
    %v79 = vunpack.c.l.bf16 %v70
    %v80 = vunpack.c.h.bf16 %v70
    %v81 = vunpack.c.l.bf16 %v71
    %v82 = vunpack.c.h.bf16 %v71
    %v83 = vunpack.c.l.bf16 %v72
    %v84 = vunpack.c.h.bf16 %v72
    %v85 = vunpack.c.l.bf16 %v73
    %v86 = vunpack.c.h.bf16 %v73
    %v87 = vunpack.c.l.bf16 %v74
    %v88 = vunpack.c.h.bf16 %v74
    %v89 = vunpack.c.l.bf16 %v75
    %v90 = vunpack.c.h.bf16 %v75
    %v91 = vunpack.c.l.bf16 %v76
    %v92 = vunpack.c.h.bf16 %v76
    %v93 = vsub.f32 %v53, %v77
    %v94 = vsub.f32 %v54, %v78
    %v95 = vsub.f32 %v55, %v79
    %v96 = vsub.f32 %v56, %v80
    %v97 = vsub.f32 %v57, %v81
    %v98 = vsub.f32 %v58, %v82
    %v99 = vsub.f32 %v59, %v83
    %v100 = vsub.f32 %v60, %v84
    %v101 = vsub.f32 %v61, %v85
    %v102 = vsub.f32 %v62, %v86
    %v103 = vsub.f32 %v63, %v87
    %v104 = vsub.f32 %v64, %v88
    %v105 = vsub.f32 %v65, %v89
    %v106 = vsub.f32 %v66, %v90
    %v107 = vsub.f32 %v67, %v91
    %v108 = vsub.f32 %v68, %v92
    %v109 = vpack.c.bf16 %v94, %v93
    %v110 = vpack.c.bf16 %v96, %v95
    %v111 = vpack.c.bf16 %v98, %v97
    %v112 = vpack.c.bf16 %v100, %v99
    %v113 = vpack.c.bf16 %v102, %v101
    %v114 = vpack.c.bf16 %v104, %v103
    %v115 = vpack.c.bf16 %v106, %v105
    %v116 = vpack.c.bf16 %v108, %v107
    %125 = vrot.lane.b32.xlu0 %v69, 16
    %v126 = vpop.permute.xlu0 %125
    %127 = vrot.lane.b32.xlu0 %v70, 16
    %v128 = vpop.permute.xlu0 %127
    %129 = vrot.lane.b32.xlu0 %v71, 16
    %v130 = vpop.permute.xlu0 %129
    %131 = vrot.lane.b32.xlu0 %v72, 16
    %v132 = vpop.permute.xlu0 %131
    %133 = vrot.lane.b32.xlu0 %v73, 16
    %v134 = vpop.permute.xlu0 %133
    %135 = vrot.lane.b32.xlu0 %v74, 16
    %v136 = vpop.permute.xlu0 %135
    %137 = vrot.lane.b32.xlu0 %v75, 16
    %v138 = vpop.permute.xlu0 %137
    %139 = vrot.lane.b32.xlu0 %v76, 16
    %v140 = vpop.permute.xlu0 %139
    %149 = vrot.lane.b32.xlu0 %v109, 32
    %v150 = vpop.permute.xlu0 %149
    %151 = vrot.lane.b32.xlu0 %v110, 32
    %v152 = vpop.permute.xlu0 %151
    %153 = vrot.lane.b32.xlu0 %v111, 32
    %v154 = vpop.permute.xlu0 %153
    %155 = vrot.lane.b32.xlu0 %v112, 32
    %v156 = vpop.permute.xlu0 %155
    %157 = vrot.lane.b32.xlu0 %v113, 32
    %v158 = vpop.permute.xlu0 %157
    %159 = vrot.lane.b32.xlu0 %v114, 32
    %v160 = vpop.permute.xlu0 %159
    %161 = vrot.lane.b32.xlu0 %v115, 32
    %v162 = vpop.permute.xlu0 %161
    %163 = vrot.lane.b32.xlu0 %v116, 32
    %v164 = vpop.permute.xlu0 %163
    %vm165 = vcmask 130048
    %v168 = vsel %vm165, %v29, %v126
    %v171 = vsel %vm165, %v30, %v128
    %v174 = vsel %vm165, %v31, %v130
    %v177 = vsel %vm165, %v32, %v132
    %v180 = vsel %vm165, %v33, %v134
    %v183 = vsel %vm165, %v34, %v136
    %v186 = vsel %vm165, %v35, %v138
    %v189 = vsel %vm165, %v36, %v140
    %vm190 = vcmask 261120
    %v192 = vsel %vm190, %v168, %v150
    %v194 = vsel %vm190, %v171, %v152
    %v196 = vsel %vm190, %v174, %v154
    %v198 = vsel %vm190, %v177, %v156
    %v200 = vsel %vm190, %v180, %v158
    %v202 = vsel %vm190, %v183, %v160
    %v204 = vsel %vm190, %v186, %v162
    %v206 = vsel %vm190, %v189, %v164
    %v207 = vld [vmem:[%s1] sm:$0xff]
    %v208 = vld [vmem:[%s1 + $0x8] sm:$0xff]
    %v209 = vld [vmem:[%s1 + $0x10] sm:$0xff]
    %v210 = vld [vmem:[%s1 + $0x18] sm:$0xff]
    %v211 = vld [vmem:[%s1 + $0x20] sm:$0xff]
    %v212 = vld [vmem:[%s1 + $0x28] sm:$0xff]
    %v219 = vunpack.c.l.b16 %v207
    %v220 = vunpack.c.h.b16 %v207
    %v221 = vunpack.c.l.b16 %v208
    %v222 = vunpack.c.h.b16 %v208
    %v223 = vunpack.c.l.b16 %v209
    %v224 = vunpack.c.h.b16 %v209
    %v225 = vunpack.c.l.b16 %v210
    %v226 = vunpack.c.h.b16 %v210
    %v227 = vunpack.c.l.b16 %v211
    %v228 = vunpack.c.h.b16 %v211
    %v229 = vunpack.c.l.b16 %v212
    %v230 = vunpack.c.h.b16 %v212
    %v231 = vpack.c.b16 %v221, %v219
    %v232 = vpack.c.b16 %v222, %v220
    %v233 = vpack.c.b16 %v225, %v223
    %v234 = vpack.c.b16 %v226, %v224
    %v235 = vpack.c.b16 %v229, %v227
    %v236 = vpack.c.b16 %v230, %v228
    %vm243 = vcmask 392192
    %v244 = vsel %vm243, %v192, 0
    %v246 = vsel %vm243, %v194, 0
    %v248 = vsel %vm243, %v196, 0
    %v250 = vsel %vm243, %v198, 0
    %v252 = vsel %vm243, %v200, 0
    %v254 = vsel %vm243, %v202, 0
    %v256 = vsel %vm243, %v204, 0
    %v258 = vsel %vm243, %v206, 0
    %260 = vmatprep.subr.bf16.mxu0 0
    %261 = vmatpush1.bf16.msra.mxu0 0
    %262 = vmatprep.subr.bf16.mxu0 0
    %263 = vmatpush1.bf16.msra.mxu0 0
    %264 = vmatprep.subr.bf16.mxu0 0
    %265 = vmatpush1.bf16.msra.mxu0 0
    %266 = vmatprep.subr.bf16.mxu0 0
    %267 = vmatpush1.bf16.msra.mxu0 0
    %268 = vmatprep.subr.bf16.mxu0 0
    %269 = vmatpush1.bf16.msra.mxu0 0
    %270 = vmatprep.subr.bf16.mxu0 %v236
    %271 = vmatpush1.bf16.msra.mxu0 %v235
    %272 = vmatprep.subr.bf16.mxu0 %v234
    %273 = vmatpush1.bf16.msra.mxu0 %v233
    %274 = vmatprep.subr.bf16.mxu0 %v232
    %275 = vmatpush1.bf16.msra.mxu0 %v231
    %276 = vmatprep.subr.bf16.mxu0 0
    %277 = vmatpush2.bf16.msra.mxu0 0
    %278 = vmatprep.subr.bf16.mxu0 0
    %279 = vmatpush2.bf16.msra.mxu0 0
    %280 = vmatprep.subr.bf16.mxu0 0
    %281 = vmatpush2.bf16.msra.mxu0 0
    %282 = vmatprep.subr.bf16.mxu0 0
    %283 = vmatpush2.bf16.msra.mxu0 0
    %284 = vmatprep.subr.bf16.mxu0 0
    %285 = vmatpush2.bf16.msra.mxu0 0
    %286 = vmatprep.subr.bf16.mxu0 0
    %287 = vmatpush2.bf16.msra.mxu0 0
    %288 = vmatprep.subr.bf16.mxu0 0
    %289 = vmatpush2.bf16.msra.mxu0 0
    %290 = vmatprep.subr.bf16.mxu0 0
    %291 = vmatpush2.bf16.msra.mxu0 0
    %292 = vmatprep.mubr.bf16.mxu0 0
    %293 = vmatmul.mubr.bf16.gmra.mxu0 %v244
    %v294 = vpop.f32.mrf.mxu0
    %v295 = vadd.f32 0.0, %v294
    %v296 = vpop.f32.mrf.mxu0
    %v297 = vadd.f32 0.0, %v296
    %v298 = vpop.f32.mrf.mxu0
    %v299 = vadd.f32 0.0, %v298
    %v300 = vpop.f32.mrf.mxu0
    %v301 = vadd.f32 0.0, %v300
    %302 = vmatprep.mubr.bf16.mxu0 0
    %303 = vmatmul.mubr.bf16.gmra.mxu0 %v246
    %v304 = vpop.f32.mrf.mxu0
    %v305 = vadd.f32 0.0, %v304
    %v306 = vpop.f32.mrf.mxu0
    %v307 = vadd.f32 0.0, %v306
    %v308 = vpop.f32.mrf.mxu0
    %v309 = vadd.f32 0.0, %v308
    %v310 = vpop.f32.mrf.mxu0
    %v311 = vadd.f32 0.0, %v310
    %312 = vmatprep.mubr.bf16.mxu0 0
    %313 = vmatmul.mubr.bf16.gmra.mxu0 %v248
    %v314 = vpop.f32.mrf.mxu0
    %v315 = vadd.f32 0.0, %v314
    %v316 = vpop.f32.mrf.mxu0
    %v317 = vadd.f32 0.0, %v316
    %v318 = vpop.f32.mrf.mxu0
    %v319 = vadd.f32 0.0, %v318
    %v320 = vpop.f32.mrf.mxu0
    %v321 = vadd.f32 0.0, %v320
    %322 = vmatprep.mubr.bf16.mxu0 0
    %323 = vmatmul.mubr.bf16.gmra.mxu0 %v250
    %v324 = vpop.f32.mrf.mxu0
    %v325 = vadd.f32 0.0, %v324
    %v326 = vpop.f32.mrf.mxu0
    %v327 = vadd.f32 0.0, %v326
    %v328 = vpop.f32.mrf.mxu0
    %v329 = vadd.f32 0.0, %v328
    %v330 = vpop.f32.mrf.mxu0
    %v331 = vadd.f32 0.0, %v330
    %332 = vmatprep.mubr.bf16.mxu0 0
    %333 = vmatmul.mubr.bf16.gmra.mxu0 %v252
    %v334 = vpop.f32.mrf.mxu0
    %v335 = vadd.f32 0.0, %v334
    %v336 = vpop.f32.mrf.mxu0
    %v337 = vadd.f32 0.0, %v336
    %v338 = vpop.f32.mrf.mxu0
    %v339 = vadd.f32 0.0, %v338
    %v340 = vpop.f32.mrf.mxu0
    %v341 = vadd.f32 0.0, %v340
    %342 = vmatprep.mubr.bf16.mxu0 0
    %343 = vmatmul.mubr.bf16.gmra.mxu0 %v254
    %v344 = vpop.f32.mrf.mxu0
    %v345 = vadd.f32 0.0, %v344
    %v346 = vpop.f32.mrf.mxu0
    %v347 = vadd.f32 0.0, %v346
    %v348 = vpop.f32.mrf.mxu0
    %v349 = vadd.f32 0.0, %v348
    %v350 = vpop.f32.mrf.mxu0
    %v351 = vadd.f32 0.0, %v350
    %352 = vmatprep.mubr.bf16.mxu0 0
    %353 = vmatmul.mubr.bf16.gmra.mxu0 %v256
    %v354 = vpop.f32.mrf.mxu0
    %v355 = vadd.f32 0.0, %v354
    %v356 = vpop.f32.mrf.mxu0
    %v357 = vadd.f32 0.0, %v356
    %v358 = vpop.f32.mrf.mxu0
    %v359 = vadd.f32 0.0, %v358
    %v360 = vpop.f32.mrf.mxu0
    %v361 = vadd.f32 0.0, %v360
    %362 = vmatprep.mubr.bf16.mxu0 0
    %363 = vmatmul.mubr.bf16.gmra.mxu0 %v258
    %v364 = vpop.f32.mrf.mxu0
    %v365 = vadd.f32 0.0, %v364
    %v366 = vpop.f32.mrf.mxu0
    %v367 = vadd.f32 0.0, %v366
    %v368 = vpop.f32.mrf.mxu0
    %v369 = vadd.f32 0.0, %v368
    %v370 = vpop.f32.mrf.mxu0
    %v371 = vadd.f32 0.0, %v370
    %372 = vdwg.mxu0
    %373 = vst [vmem:[#allocation2] sm:$0xff] %v295
    %374 = vst [vmem:[#allocation2 + $0x8] sm:$0xff] %v297
    %375 = vst [vmem:[#allocation2 + $0x10] sm:$0xff] %v299
    %376 = vst [vmem:[#allocation2 + $0x18] sm:$0xff] %v301
    %377 = vst [vmem:[#allocation2 + $0x20] sm:$0xff] %v305
    %378 = vst [vmem:[#allocation2 + $0x28] sm:$0xff] %v307
    %379 = vst [vmem:[#allocation2 + $0x30] sm:$0xff] %v309
    %380 = vst [vmem:[#allocation2 + $0x38] sm:$0xff] %v311
    %381 = vst [vmem:[#allocation2 + $0x40] sm:$0xff] %v315
    %382 = vst [vmem:[#allocation2 + $0x48] sm:$0xff] %v317
    %383 = vst [vmem:[#allocation2 + $0x50] sm:$0xff] %v319
    %384 = vst [vmem:[#allocation2 + $0x58] sm:$0xff] %v321
    %385 = vst [vmem:[#allocation2 + $0x60] sm:$0xff] %v325
    %386 = vst [vmem:[#allocation2 + $0x68] sm:$0xff] %v327
    %387 = vst [vmem:[#allocation2 + $0x70] sm:$0xff] %v329
    %388 = vst [vmem:[#allocation2 + $0x78] sm:$0xff] %v331
    %389 = vst [vmem:[#allocation2 + $0x80] sm:$0xff] %v335
    %390 = vst [vmem:[#allocation2 + $0x88] sm:$0xff] %v337
    %391 = vst [vmem:[#allocation2 + $0x90] sm:$0xff] %v339
    %392 = vst [vmem:[#allocation2 + $0x98] sm:$0xff] %v341
    %393 = vst [vmem:[#allocation2 + $0xa0] sm:$0xff] %v345
    %394 = vst [vmem:[#allocation2 + $0xa8] sm:$0xff] %v347
    %395 = vst [vmem:[#allocation2 + $0xb0] sm:$0xff] %v349
    %396 = vst [vmem:[#allocation2 + $0xb8] sm:$0xff] %v351
    %397 = vst [vmem:[#allocation2 + $0xc0] sm:$0xff] %v355
    %398 = vst [vmem:[#allocation2 + $0xc8] sm:$0xff] %v357
    %399 = vst [vmem:[#allocation2 + $0xd0] sm:$0xff] %v359
    %400 = vst [vmem:[#allocation2 + $0xd8] sm:$0xff] %v361
    %401 = vst [vmem:[#allocation2 + $0xe0] sm:$0xff] %v365
    %402 = vst [vmem:[#allocation2 + $0xe8] sm:$0xff] %v367
    %403 = vst [vmem:[#allocation2 + $0xf0] sm:$0xff] %v369
    %404 = vst [vmem:[#allocation2 + $0xf8] sm:$0xff] %v371
    // Predicated region
    $region10: #{tpu_custom_call.1} parent=1 // pred_check
      _
    $region11: #{tpu_custom_call.1} parent=1 // pred_check_branch
      %406 = sbr.rel (0) target = $region13
    $region12: #{tpu_custom_call.1} parent=1 // pred_region
      %s408 = ssub.s32 4096, 4096
      %409 = vsyncadd [#allocation3], %s408
      %s410 = sshll.u32 [#allocation2], 4
      %s411 = int_to_ptr.vmem [resolvable:$true] %s410
      %416 = dma.vmem_to_hbm [thread:$0]  %s411, 4096, %s2, [#allocation3], 256, 256, 16
    $region13: #{tpu_custom_call.1} parent=1 // pred_fallthru
      _
    // Predicated region
    $region14: #{tpu_custom_call.1} parent=1 // pred_check
      _
    $region15: #{tpu_custom_call.1} parent=1 // pred_check_branch
      %418 = sbr.rel (0) target = $region17
    $region16: #{tpu_custom_call.1} parent=1 // pred_region
      %419 = dma.done [#allocation3], 4096
    $region17: #{tpu_custom_call.1} parent=1 // pred_fallthru
      _
    %420 = vsyncpa [#allocation3], 1

</llo_original>
